<compile_context>
chip_gen: v6e
topology: v6e:2x2x1
jax: 0.10.0
libtpu: 0.0.40
codegen_flags: <defaults>
</compile_context>

<pallas_src>
import functools

import jax
import jax.numpy as jnp
from jax.experimental import pallas as pl
from jax.experimental.pallas import tpu as pltpu


def _round_up(x, m):
    return (x + m - 1) // m * m


def _sublane_multiple(dtype):
    # f32 -> 8, bf16 -> 16, int8/fp8 -> 32
    itemsize = jnp.dtype(dtype).itemsize
    return max(8, 32 // max(1, itemsize))


def _tpu_budgets():
    """Per-generation VMEM budgets (bytes)."""
    try:
        phys = pltpu.get_tpu_info().vmem_capacity_bytes
    except Exception:
        phys = 64 * 1024 * 1024  # conservative default (v7x-sized)
    if phys >= 128 * 1024 * 1024:
        # v5e / v6e: 128 MiB physical VMEM per TensorCore
        return dict(vmem_limit=96 << 20, block_bytes=8 << 20, w_budget=24 << 20)
    # v7x: 64 MiB physical VMEM per TensorCore -> leave headroom for Mosaic scratch
    return dict(vmem_limit=40 << 20, block_bytes=4 << 20, w_budget=12 << 20)


def _choose_row_tile(rows, dim, dtype, block_bytes):
    sub = _sublane_multiple(dtype)
    # Budget for the streamed input block plus its in-kernel f32 temporaries.
    bytes_per_row = dim * (jnp.dtype(dtype).itemsize + 4)
    rt = max(sub, (block_bytes // max(1, bytes_per_row)) // sub * sub)
    rt = min(rt, _round_up(rows, sub))
    if rows > sub:
        # Keep >= 2 row-grid steps so both v7x TensorCores get work.
        rt = min(rt, max(sub, _round_up(-(-rows // 2), sub)))
    return max(rt, sub)


def _choose_n_tile(dim, dim_out_p, w_itemsize, w_budget_bytes):
    # Keep W fully resident (single lane-dense block) whenever it fits the budget
    # (x2 for double-buffering headroom); the constant block index means it is
    # only DMA'd once for the whole grid.
    if dim * dim_out_p * w_itemsize * 2 <= w_budget_bytes:
        return dim_out_p
    nt = 512
    while nt > 128:
        if dim_out_p % nt == 0 and dim * nt * w_itemsize * 2 <= w_budget_bytes:
            return nt
        nt //= 2
    return 128


# ----------------------------------------------------------------------------
# Plain LayerNorm kernel (generic PreNorm: fn stays outside as JAX glue)
# ----------------------------------------------------------------------------
def _layernorm_kernel(x_ref, w_ref, b_ref, o_ref, *, eps: float):
    # x_ref: (row_tile, dim) ; w_ref / b_ref: (1, dim)
    x = x_ref[...].astype(jnp.float32)
    mean = jnp.mean(x, axis=-1, keepdims=True)
    var = jnp.mean(jnp.square(x - mean), axis=-1, keepdims=True)  # two-pass, f32
    inv = jax.lax.rsqrt(var + eps)
    w = w_ref[...].astype(jnp.float32)
    b = b_ref[...].astype(jnp.float32)
    o_ref[...] = ((x - mean) * (inv * w) + b).astype(o_ref.dtype)


def layernorm_pallas(x2d, weight, bias, *, eps=1e-5, row_tile=None):
    """LayerNorm over the last axis of a 2-D array (rows, dim)."""
    rows, dim = x2d.shape
    budgets = _tpu_budgets()
    if row_tile is None:
        row_tile = _choose_row_tile(rows, dim, x2d.dtype, budgets["block_bytes"])

    padded_rows = _round_up(rows, row_tile)
    x_in = x2d
    if padded_rows != rows:
        x_in = jnp.pad(x2d, ((0, padded_rows - rows), (0, 0)))

    w2 = weight.reshape(1, dim)
    b2 = bias.reshape(1, dim)

    kernel = functools.partial(_layernorm_kernel, eps=eps)
    out = pl.pallas_call(
        kernel,
        out_shape=jax.ShapeDtypeStruct((padded_rows, dim), x2d.dtype),
        grid_spec=pltpu.PrefetchScalarGridSpec(
            num_scalar_prefetch=0,
            grid=(padded_rows // row_tile,),
            in_specs=[
                pl.BlockSpec((row_tile, dim), lambda i: (i, 0)),
                pl.BlockSpec((1, dim), lambda i: (0, 0)),
                pl.BlockSpec((1, dim), lambda i: (0, 0)),
            ],
            out_specs=pl.BlockSpec((row_tile, dim), lambda i: (i, 0)),
        ),
        compiler_params=pltpu.CompilerParams(
            dimension_semantics=("parallel",),
            vmem_limit_bytes=budgets["vmem_limit"],
        ),
    )(x_in, w2, b2)

    if padded_rows != rows:
        out = out[:rows]
    return out


# ----------------------------------------------------------------------------
# Fused LayerNorm + Linear kernel (PreNorm whose fn is a Linear(dim, dim_out))
# ----------------------------------------------------------------------------
def _prenorm_linear_kernel(x_ref, lnw_ref, lnb_ref, w_ref, bl_ref, o_ref, y_ref,
                           *, eps: float):
    # x_ref: (row_tile, dim); lnw/lnb: (1, dim); w_ref: (dim, n_tile);
    # bl_ref: (1, n_tile); y_ref: persistent VMEM scratch (row_tile, dim).
    # LayerNorm is computed once per row tile (j == 0) and cached in y_ref; the
    # inner j steps only run the MXU matmul in the native weight dtype.
    @pl.when(pl.program_id(1) == 0)
    def _():
        x = x_ref[...].astype(jnp.float32)
        mean = jnp.mean(x, axis=-1, keepdims=True)
        var = jnp.mean(jnp.square(x - mean), axis=-1, keepdims=True)
        inv = jax.lax.rsqrt(var + eps)
        y = (x - mean) * (inv * lnw_ref[...].astype(jnp.float32)) \
            + lnb_ref[...].astype(jnp.float32)
        y_ref[...] = y.astype(y_ref.dtype)

    acc = jnp.dot(y_ref[...], w_ref[...], preferred_element_type=jnp.float32)
    o_ref[...] = (acc + bl_ref[...].astype(jnp.float32)).astype(o_ref.dtype)


def prenorm_linear_pallas(x2d, ln_w, ln_b, lin_w, lin_b, *, eps=1e-5,
                          row_tile=None, n_tile=None):
    """Fused LayerNorm(dim) -> Linear(dim, dim_out): y = LN(x) @ W + b."""
    rows, dim = x2d.shape
    dim_in, dim_out = lin_w.shape
    assert dim_in == dim

    budgets = _tpu_budgets()
    mm_dtype = lin_w.dtype  # MXU operand dtype (no f32 upcast of W / y)

    # Lane-dense output: pad dim_out to a multiple of 128, slice afterwards.
    dim_out_p = _round_up(dim_out, 128)
    lin_w_p = lin_w
    lin_b_p = lin_b
    if dim_out_p != dim_out:
        lin_w_p = jnp.pad(lin_w, ((0, 0), (0, dim_out_p - dim_out)))
        lin_b_p = jnp.pad(lin_b, ((0, dim_out_p - dim_out),))

    if row_tile is None:
        row_tile = _choose_row_tile(rows, dim, x2d.dtype, budgets["block_bytes"])
    if n_tile is None:
        n_tile = _choose_n_tile(dim, dim_out_p, jnp.dtype(mm_dtype).itemsize,
                                budgets["w_budget"])

    padded_rows = _round_up(rows, row_tile)
    x_in = x2d
    if padded_rows != rows:
        x_in = jnp.pad(x2d, ((0, padded_rows - rows), (0, 0)))

    lnw2 = ln_w.reshape(1, dim)
    lnb2 = ln_b.reshape(1, dim)
    linb2 = lin_b_p.reshape(1, dim_out_p)

    kernel = functools.partial(_prenorm_linear_kernel, eps=eps)
    out = pl.pallas_call(
        kernel,
        out_shape=jax.ShapeDtypeStruct((padded_rows, dim_out_p), x2d.dtype),
        grid_spec=pltpu.PrefetchScalarGridSpec(
            num_scalar_prefetch=0,
            grid=(padded_rows // row_tile, dim_out_p // n_tile),
            in_specs=[
                pl.BlockSpec((row_tile, dim), lambda i, j: (i, 0)),
                pl.BlockSpec((1, dim), lambda i, j: (0, 0)),
                pl.BlockSpec((1, dim), lambda i, j: (0, 0)),
                pl.BlockSpec((dim, n_tile), lambda i, j: (0, j)),
                pl.BlockSpec((1, n_tile), lambda i, j: (0, j)),
            ],
            out_specs=pl.BlockSpec((row_tile, n_tile), lambda i, j: (i, j)),
            scratch_shapes=[pltpu.VMEM((row_tile, dim), mm_dtype)],
        ),
        compiler_params=pltpu.CompilerParams(
            # j must be "arbitrary": the cached LN scratch assumes all j steps of
            # a given row tile run on the same core, in order.
            dimension_semantics=("parallel", "arbitrary"),
            vmem_limit_bytes=budgets["vmem_limit"],
        ),
    )(x_in, lnw2, lnb2, lin_w_p, linb2)

    if padded_rows != rows:
        out = out[:rows]
    if dim_out_p != dim_out:
        out = out[:, :dim_out]
    return out


# ----------------------------------------------------------------------------
# Module wrappers
# ----------------------------------------------------------------------------
class PreNorm:
    """JAX/Pallas equivalent of the PyTorch PreNorm module:
        forward(x, **kwargs) = fn(LayerNorm(dim)(x), **kwargs)
    LayerNorm params initialized like PyTorch defaults (weight=1, bias=0).
    `fn` is an arbitrary callable and stays plain JAX. If `fn` is a Linear,
    prefer PreNormFusedLinear (keeps the normalized activation out of HBM).
    """

    def __init__(self, dim, fn):
        self.dim = dim
        self.fn = fn
        self.weight = jnp.ones((dim,), dtype=jnp.float32)
        self.bias = jnp.zeros((dim,), dtype=jnp.float32)
        self.eps = 1e-5

    def __call__(self, x, **kwargs):
        orig_shape = x.shape
        x2d = x.reshape(-1, self.dim)
        normed = layernorm_pallas(x2d, self.weight, self.bias, eps=self.eps)
        normed = normed.reshape(orig_shape)
        return self.fn(normed, **kwargs)


class PreNormFusedLinear:
    """Optimized PreNorm for the common case fn == Linear(dim, dim_out):
    LayerNorm + matmul in a single pallas_call (LN cached per row tile,
    native-dtype MXU operands, f32 accumulation, resident W when it fits)."""

    def __init__(self, dim, dim_out, lin_w, lin_b):
        self.dim = dim
        self.dim_out = dim_out
        self.weight = jnp.ones((dim,), dtype=jnp.float32)
        self.bias = jnp.zeros((dim,), dtype=jnp.float32)
        self.lin_w = lin_w  # (dim, dim_out)
        self.lin_b = lin_b  # (dim_out,)
        self.eps = 1e-5

    def __call__(self, x):
        orig_shape = x.shape
        x2d = x.reshape(-1, self.dim)
        out = prenorm_linear_pallas(x2d, self.weight, self.bias,
                                    self.lin_w, self.lin_b, eps=self.eps)
        return out.reshape(orig_shape[:-1] + (self.dim_out,))


if __name__ == "__main__":
    key = jax.random.PRNGKey(0)
    batch, seq, dim = 2, 8, 32
    kx, kw, kb = jax.random.split(key, 3)
    x = jax.random.normal(kx, (batch, seq, dim), dtype=jnp.float32)

    # Example `fn`: a deterministic Linear(dim, dim).
    w_fn = jax.random.normal(kw, (dim, dim), dtype=jnp.float32) * 0.02
    b_fn = jax.random.normal(kb, (dim,), dtype=jnp.float32) * 0.02

    def fn(y):
        return jnp.dot(y, w_fn) + b_fn

    # Generic path: Pallas LayerNorm + plain-JAX fn.
    prenorm = PreNorm(dim, fn)
    out_generic = jax.block_until_ready(prenorm(x))

    # Fused path: LayerNorm + Linear in one pallas_call.
    fused = PreNormFusedLinear(dim, dim, w_fn, b_fn)
    out_fused = jax.block_until_ready(fused(x))

    # Reference (pure JAX LayerNorm + fn).
    mean = jnp.mean(x, axis=-1, keepdims=True)
    var = jnp.mean((x - mean) ** 2, axis=-1, keepdims=True)
    normed_ref = (x - mean) * jax.lax.rsqrt(var + 1e-5)
    normed_ref = normed_ref * prenorm.weight + prenorm.bias
    ref = fn(normed_ref)

    assert out_generic.shape == (batch, seq, dim)
    assert out_fused.shape == (batch, seq, dim)
    assert jnp.allclose(out_generic, ref, atol=1e-4, rtol=1e-4)
    assert jnp.allclose(out_fused, ref, atol=1e-4, rtol=1e-4)

    # Exercise the non-divisible-rows (padding) path: rows = 3*5 = 15.
    x_odd = jax.random.normal(jax.random.PRNGKey(1), (3, 5, dim), dtype=jnp.float32)
    out_odd = jax.block_until_ready(PreNorm(dim, lambda y: y)(x_odd))
    mean_o = jnp.mean(x_odd, axis=-1, keepdims=True)
    var_o = jnp.mean((x_odd - mean_o) ** 2, axis=-1, keepdims=True)
    ref_o = (x_odd - mean_o) * jax.lax.rsqrt(var_o + 1e-5)
    assert jnp.allclose(out_odd, ref_o, atol=1e-5, rtol=1e-5)

    print("KERNEL_OK")
</pallas_src>

<mosaic_0001>
module attributes {stable_mosaic.version = 11 : i64} {
  func.func @_layernorm_kernel(%arg0: i32, %arg1: memref<8x32xf32, #tpu.memory_space<vmem>>, %arg2: memref<1x32xf32, #tpu.memory_space<vmem>>, %arg3: memref<1x32xf32, #tpu.memory_space<vmem>>, %arg4: memref<8x32xf32, #tpu.memory_space<vmem>>) attributes {dimension_semantics = [#tpu.dimension_semantics<parallel>], iteration_bounds = array<i64: 2>, scalar_prefetch = 0 : i64, scratch_operands = 0 : i64, tpu.core_type = #tpu.core_type<tc>, window_params = [{transform_indices = @transform_0, window_bounds = array<i64: 8, 32>}, {pipeline_mode = #tpu.pipeline_mode<synchronous>, transform_indices = @transform_1, window_bounds = array<i64: 1, 32>}, {pipeline_mode = #tpu.pipeline_mode<synchronous>, transform_indices = @transform_2, window_bounds = array<i64: 1, 32>}, {transform_indices = @transform_3, window_bounds = array<i64: 8, 32>}]} {
    %c0 = arith.constant 0 : index
    %c0_0 = arith.constant 0 : index
    %0 = vector.load %arg1[%c0, %c0_0] : memref<8x32xf32, #tpu.memory_space<vmem>>, vector<8x32xf32>
    %cst = arith.constant dense<0.000000e+00> : vector<8xf32>
    %1 = vector.multi_reduction <add>, %0, %cst [1] : vector<8x32xf32> to vector<8xf32>
    %2 = vector.shape_cast %1 : vector<8xf32> to vector<8x1xf32>
    %cst_1 = arith.constant 3.200000e+01 : f32
    %3 = vector.broadcast %cst_1 : f32 to vector<8x1xf32>
    %4 = arith.divf %2, %3 : vector<8x1xf32>
    %5 = vector.broadcast %4 : vector<8x1xf32> to vector<8x32xf32>
    %6 = arith.subf %0, %5 : vector<8x32xf32>
    %7 = arith.mulf %6, %6 : vector<8x32xf32>
    %cst_2 = arith.constant dense<0.000000e+00> : vector<8xf32>
    %8 = vector.multi_reduction <add>, %7, %cst_2 [1] : vector<8x32xf32> to vector<8xf32>
    %9 = vector.shape_cast %8 : vector<8xf32> to vector<8x1xf32>
    %cst_3 = arith.constant 3.200000e+01 : f32
    %10 = vector.broadcast %cst_3 : f32 to vector<8x1xf32>
    %11 = arith.divf %9, %10 : vector<8x1xf32>
    %cst_4 = arith.constant 9.99999974E-6 : f32
    %12 = vector.broadcast %cst_4 : f32 to vector<8x1xf32>
    %13 = arith.addf %11, %12 : vector<8x1xf32>
    %14 = math.rsqrt %13 : vector<8x1xf32>
    %c0_5 = arith.constant 0 : index
    %c0_6 = arith.constant 0 : index
    %15 = vector.load %arg2[%c0_5, %c0_6] : memref<1x32xf32, #tpu.memory_space<vmem>>, vector<1x32xf32>
    %c0_7 = arith.constant 0 : index
    %c0_8 = arith.constant 0 : index
    %16 = vector.load %arg3[%c0_7, %c0_8] : memref<1x32xf32, #tpu.memory_space<vmem>>, vector<1x32xf32>
    %17 = vector.broadcast %4 : vector<8x1xf32> to vector<8x32xf32>
    %18 = arith.subf %0, %17 : vector<8x32xf32>
    %19 = vector.broadcast %14 : vector<8x1xf32> to vector<8x32xf32>
    %20 = vector.broadcast %15 : vector<1x32xf32> to vector<8x32xf32>
    %21 = arith.mulf %19, %20 : vector<8x32xf32>
    %22 = arith.mulf %18, %21 : vector<8x32xf32>
    %23 = vector.broadcast %16 : vector<1x32xf32> to vector<8x32xf32>
    %24 = arith.addf %22, %23 : vector<8x32xf32>
    %c0_9 = arith.constant 0 : index
    %c0_10 = arith.constant 0 : index
    %25 = vector.load %arg4[%c0_9, %c0_10] : memref<8x32xf32, #tpu.memory_space<vmem>>, vector<8x32xf32>
    tpu.vector_store %arg4[%c0_9, %c0_10], %24 {strides = array<i32>} : memref<8x32xf32, #tpu.memory_space<vmem>>, vector<8x32xf32>,
    return
  }
  func.func @transform_0(%arg0: i32) -> (i32, i32) {
    %c0_i32 = arith.constant 0 : i32
    %c0_i32_0 = arith.constant 0 : i32
    return %arg0, %c0_i32 : i32, i32
  }
  func.func @transform_1(%arg0: i32) -> (i32, i32) {
    %c0_i32 = arith.constant 0 : i32
    %c0_i32_0 = arith.constant 0 : i32
    %c0_i32_1 = arith.constant 0 : i32
    return %c0_i32, %c0_i32_0 : i32, i32
  }
  func.func @transform_2(%arg0: i32) -> (i32, i32) {
    %c0_i32 = arith.constant 0 : i32
    %c0_i32_0 = arith.constant 0 : i32
    %c0_i32_1 = arith.constant 0 : i32
    return %c0_i32, %c0_i32_0 : i32, i32
  }
  func.func @transform_3(%arg0: i32) -> (i32, i32) {
    %c0_i32 = arith.constant 0 : i32
    %c0_i32_0 = arith.constant 0 : i32
    return %arg0, %c0_i32 : i32, i32
  }
}

</mosaic_0001>

<llo_original>
// kernel: tpu_custom_call.1
$region0: #{tpu_custom_call.1}
  #allocation0 [shape = 'u32[]', space=smem, size = 0x4, offset = 0x4, fixed_abs, tag = 'smem constant byte address 0x4 - core index']
  #allocation1 [shape = 'u32[144,128]{1,0:T(1,128)}', space=vmem, size = 0x12000, scoped, tag = 'internal scratch']
  %s0 = inlined_call_operand.hbm [shape: f32[16,32], index: 0, kind: input, shape index: {}]
  %s1 = inlined_call_operand.vmem [shape: f32[1,32], index: 1, kind: input, shape index: {}]
  %s2 = inlined_call_operand.vmem [shape: f32[1,32], index: 2, kind: input, shape index: {}]
  %s3 = inlined_call_operand.hbm [shape: f32[16,32], index: 3, kind: output, shape index: {}]
  %s4 = sld [smem:[#allocation0]]
  $region49: #{tpu_custom_call.1} parent=0
    _
  %s6 = ssub.s32 1, %s4
  %s7 = scalar_select 0, %s6, %s4
  $region1: #{tpu_custom_call.1} parent=0
    #allocation2 [shape = 'u8[8192]{0}', space=vmem, size = 0x2000, scoped, tag = 'input window, operand 0']
    #allocation3 [shape = 's32[2]{0}', space=sflag, size = 0x8, scoped, tag = 'scoped memory for tpu_custom_call.1']
    #allocation4 [shape = 's32[2]{0}', space=sflag, size = 0x8, scoped, tag = 'scoped memory for tpu_custom_call.1']
    #allocation5 [shape = 'u8[8192]{0}', space=vmem, size = 0x2000, scoped, tag = 'output window, operand 0']
    %8 = vsyncpa [#allocation3], 0
    %s9 = scalar_lea.sflag [#allocation3], 1
    %10 = vsyncpa %s9, 0
    %11 = vsyncpa [#allocation4], 0
    %s12 = scalar_lea.sflag [#allocation4], 1
    %13 = vsyncpa %s12, 0
    loop: start=0, step=1, limit=4
    $region2: #{tpu_custom_call.1} parent=1 // loop_pre_header
      _
    $region3: #{tpu_custom_call.1} parent=1 // loop_header
      %s15 = sphi 0, %s19
      %p16 = scmp.ge.s32.totalorder %s15, 4
      %s25 = sphi 0, %s27
      %s28 = sphi 0, %s25
      %s29 = sphi 0, %s28
      %s45 = sphi 0, %s29
      %s49 = sphi 0, %s49
      %s51 = sphi 0, %s49
      %s52 = sphi 0, %s51
      %s66 = sphi 0, %s52
      %s70 = sphi 0, %s70
      %s72 = sphi 0, %s70
      %s73 = sphi 0, %s72
      %s87 = sphi 0, %s73
      %s93 = sphi 0, %s95
      %s96 = sphi 0, %s93
      %s97 = sphi 0, %s96
      %s113 = sphi 0, %s97
    $region4: #{tpu_custom_call.1} parent=1 // loop_header_branch
      %18 = sbr.rel (%p16) target = $region8
    $region5: #{tpu_custom_call.1} parent=1 // loop_body
      %s20 = ssub.s32 %s15, 1
      %s21 = ssub.s32 %s15, 2
      %s22 = sadd.s32 %s15, 1
      %s23 = ssub.s32 %s15, %s22
      %p24 = scmp.eq.s32.totalorder %s23, 0
      %s26 = sadd.s32 %s25, 1
      %s27 = scalar_select %p24, %s25, %s26
      %p30 = pneg %p24
      %p31 = scmp.eq.s32.totalorder %s15, 1
      %p32 = por %p30, %p31
      %p33 = scmp.ne.s32.totalorder %s25, %s28
      %p34 = scmp.eq.s32.totalorder %s15, 0
      %p35 = por %p33, %p34
      %p36 = scmp.ne.s32.totalorder %s25, %s28
      %p37 = scmp.eq.s32.totalorder %s20, 1
      %p38 = por %p36, %p37
      %p39 = scmp.ne.s32.totalorder %s28, %s29
      %p40 = scmp.eq.s32.totalorder %s20, 0
      %p41 = por %p39, %p40
      %p42 = scmp.ne.s32.totalorder %s28, %s29
      %p43 = scmp.eq.s32.totalorder %s21, 1
      %p44 = por %p42, %p43
      %p46 = scmp.ne.s32.totalorder %s29, %s45
      %p47 = scmp.eq.s32.totalorder %s21, 0
      %p48 = por %p46, %p47
      %s50 = sadd.s32 %s49, 1
      %p53 = scmp.eq.s32.totalorder %s15, 1
      %p54 = scmp.ne.s32.totalorder %s49, %s51
      %p55 = scmp.eq.s32.totalorder %s15, 0
      %p56 = por %p54, %p55
      %p57 = scmp.ne.s32.totalorder %s49, %s51
      %p58 = scmp.eq.s32.totalorder %s20, 1
      %p59 = por %p57, %p58
      %p60 = scmp.ne.s32.totalorder %s51, %s52
      %p61 = scmp.eq.s32.totalorder %s20, 0
      %p62 = por %p60, %p61
      %p63 = scmp.ne.s32.totalorder %s51, %s52
      %p64 = scmp.eq.s32.totalorder %s21, 1
      %p65 = por %p63, %p64
      %p67 = scmp.ne.s32.totalorder %s52, %s66
      %p68 = scmp.eq.s32.totalorder %s21, 0
      %p69 = por %p67, %p68
      %s71 = sadd.s32 %s70, 1
      %p74 = scmp.eq.s32.totalorder %s15, 1
      %p75 = scmp.ne.s32.totalorder %s70, %s72
      %p76 = scmp.eq.s32.totalorder %s15, 0
      %p77 = por %p75, %p76
      %p78 = scmp.ne.s32.totalorder %s70, %s72
      %p79 = scmp.eq.s32.totalorder %s20, 1
      %p80 = por %p78, %p79
      %p81 = scmp.ne.s32.totalorder %s72, %s73
      %p82 = scmp.eq.s32.totalorder %s20, 0
      %p83 = por %p81, %p82
      %p84 = scmp.ne.s32.totalorder %s72, %s73
      %p85 = scmp.eq.s32.totalorder %s21, 1
      %p86 = por %p84, %p85
      %p88 = scmp.ne.s32.totalorder %s73, %s87
      %p89 = scmp.eq.s32.totalorder %s21, 0
      %p90 = por %p88, %p89
      %s91 = ssub.s32 %s15, %s22
      %p92 = scmp.eq.s32.totalorder %s91, 0
      %s94 = sadd.s32 %s93, 1
      %s95 = scalar_select %p92, %s93, %s94
      %p98 = pneg %p92
      %p99 = scmp.eq.s32.totalorder %s15, 1
      %p100 = por %p98, %p99
      %p101 = scmp.ne.s32.totalorder %s93, %s96
      %p102 = scmp.eq.s32.totalorder %s15, 0
      %p103 = por %p101, %p102
      %p104 = scmp.ne.s32.totalorder %s93, %s96
      %p105 = scmp.eq.s32.totalorder %s20, 1
      %p106 = por %p104, %p105
      %p107 = scmp.ne.s32.totalorder %s96, %s97
      %p108 = scmp.eq.s32.totalorder %s20, 0
      %p109 = por %p107, %p108
      %p110 = scmp.ne.s32.totalorder %s96, %s97
      %p111 = scmp.eq.s32.totalorder %s21, 1
      %p112 = por %p110, %p111
      %p114 = scmp.ne.s32.totalorder %s97, %s113
      %p115 = scmp.eq.s32.totalorder %s21, 0
      %p116 = por %p114, %p115
      %p117 = scmp.le.s32.totalorder 1, %s15
      %p118 = scmp.lt.s32.totalorder %s15, 3
      %p119 = pnand %p117, %p118
      %p120 = pneg %p119
      // Predicated region
      $region9: #{tpu_custom_call.1} parent=5 // pred_check
        _
      $region10: #{tpu_custom_call.1} parent=5 // pred_check_branch
        %122 = sbr.rel (%p119) target = $region12
      $region11: #{tpu_custom_call.1} parent=5 // pred_region
        %s123 = ssub.s32 %s15, 1
        // Predicated region
        $region13: #{tpu_custom_call.1} parent=11 // pred_check
          %p124 = pneg %p62
        $region14: #{tpu_custom_call.1} parent=11 // pred_check_branch
          %126 = sbr.rel (%p124) target = $region16
        $region15: #{tpu_custom_call.1} parent=11 // pred_region
          _
        $region16: #{tpu_custom_call.1} parent=11 // pred_fallthru
          _
        // Predicated region
        $region17: #{tpu_custom_call.1} parent=11 // pred_check
          %p127 = pneg %p83
        $region18: #{tpu_custom_call.1} parent=11 // pred_check_branch
          %129 = sbr.rel (%p127) target = $region20
        $region19: #{tpu_custom_call.1} parent=11 // pred_region
          _
        $region20: #{tpu_custom_call.1} parent=11 // pred_fallthru
          _
      $region12: #{tpu_custom_call.1} parent=5 // pred_fallthru
        _
      %p130 = scmp.lt.s32.totalorder %s15, 2
      // Predicated region
      $region21: #{tpu_custom_call.1} parent=5 // pred_check
        %p131 = pneg %p130
      $region22: #{tpu_custom_call.1} parent=5 // pred_check_branch
        %133 = sbr.rel (%p131) target = $region24
      $region23: #{tpu_custom_call.1} parent=5 // pred_region
        // Predicated region
        $region25: #{tpu_custom_call.1} parent=23 // pred_check
          %p134 = pneg %p35
        $region26: #{tpu_custom_call.1} parent=23 // pred_check_branch
          %136 = sbr.rel (%p134) target = $region28
        $region27: #{tpu_custom_call.1} parent=23 // pred_region
          %s137 = sand.u32 %s25, 1
          %s138 = scalar_lea.sflag [#allocation3], %s137
          %s139 = sand.u32 %s25, 1
          %s140 = smul.addr %s139, 8
          %s141 = scalar_lea.vmem [#allocation2], %s140
          %s143 = ssub.s32 128, 128
          %144 = vsyncadd %s138, %s143
          %s145 = smul.addr %s15, 128
          %s146 = scalar_lea.hbm %s0, %s145
          %s148 = sshll.u32 %s141, 4
          %s149 = int_to_ptr.vmem [resolvable:$true] %s148
          %151 = dma.hbm_to_vmem [thread:$0]  %s146, 128, %s149, %s138
        $region28: #{tpu_custom_call.1} parent=23 // pred_fallthru
          _
      $region24: #{tpu_custom_call.1} parent=5 // pred_fallthru
        _
      %p152 = scmp.le.s32.totalorder 1, %s15
      %p153 = scmp.lt.s32.totalorder %s15, 3
      %p154 = pnand %p152, %p153
      %p155 = pneg %p154
      // Predicated region
      $region29: #{tpu_custom_call.1} parent=5 // pred_check
        _
      $region30: #{tpu_custom_call.1} parent=5 // pred_check_branch
        %157 = sbr.rel (%p154) target = $region32
      $region31: #{tpu_custom_call.1} parent=5 // pred_region
        %s158 = ssub.s32 %s15, 1
        %s159 = sand.u32 %s28, 1
        %s160 = scalar_lea.sflag [#allocation3], %s159
        %s161 = sand.u32 %s28, 1
        %s162 = smul.addr %s161, 8
        %s163 = scalar_lea.vmem [#allocation2], %s162
        // Predicated region
        $region33: #{tpu_custom_call.1} parent=31 // pred_check
          %p164 = pneg %p41
        $region34: #{tpu_custom_call.1} parent=31 // pred_check_branch
          %166 = sbr.rel (%p164) target = $region36
        $region35: #{tpu_custom_call.1} parent=31 // pred_region
          %167 = dma.done %s160, 128
        $region36: #{tpu_custom_call.1} parent=31 // pred_fallthru
          _
        %s168 = sand.u32 %s28, 1
        %s169 = scalar_lea.sflag [#allocation3], %s168
        %s170 = sand.u32 %s28, 1
        %s171 = smul.addr %s170, 8
        %s172 = scalar_lea.vmem [#allocation2], %s171
        %p173 = pneg %p41
        %p174 = pneg %p38
        %p175 = pneg %p62
        %p176 = pneg %p59
        %p177 = pneg %p83
        %p178 = pneg %p80
        %p179 = pneg %p109
        %p180 = pneg %p106
        %s181 = sand.u32 %s96, 1
        %s182 = scalar_lea.sflag [#allocation4], %s181
        %s183 = sand.u32 %s96, 1
        %s184 = smul.addr %s183, 8
        %s185 = scalar_lea.vmem [#allocation5], %s184
        %v186 = vld [vmem:[%s163] sm:$0xff]
        %vm187 = vcmask 261120
        %v188 = vsel %vm187, %v186, 0.0
        %189 = vadd.xlane.f32.xlu0 %v188
        %v190 = vpop.xlane.xlu0 %189
        %v191 = vrcp.pop 32.0
        %v192 = vmul.f32 %v190, %v191
        %v193 = vsub.f32 %v186, %v192
        %v194 = vmul.f32 %v193, %v193
        %v195 = vsel %vm187, %v194, 0.0
        %196 = vadd.xlane.f32.xlu0 %v195
        %v197 = vpop.xlane.xlu0 %196
        %v198 = vmul.f32 %v197, %v191
        %v199 = vadd.f32 %v198, 1e-05
        %v200 = vrsqrt.pop %v199
        %v201 = vld [vmem:[%s1] sm:$0x1]
        %v202 = vld [vmem:[%s2] sm:$0x1]
        %v204 = vlaneseq
        %v205 = vshrl.u32 %v204, 7
        %v206 = vsub.s32 0, %v205
        %v207 = vrot.slane %v201, %v206
        %v209 = vmul.f32 %v200, %v207
        %v210 = vmul.f32 %v193, %v209
        %v212 = vlaneseq
        %v213 = vshrl.u32 %v212, 7
        %v214 = vsub.s32 0, %v213
        %v215 = vrot.slane %v202, %v214
        %v217 = vadd.f32 %v210, %v215
        %218 = vst.msk [vmem:[%s185] sm:$0xff] %vm187, %v217
        %s219 = sand.u32 %s96, 1
        %s220 = scalar_lea.sflag [#allocation4], %s219
        %s221 = sand.u32 %s96, 1
        %s222 = smul.addr %s221, 8
        %s223 = scalar_lea.vmem [#allocation5], %s222
        // Predicated region
        $region37: #{tpu_custom_call.1} parent=31 // pred_check
          %p224 = pneg %p106
        $region38: #{tpu_custom_call.1} parent=31 // pred_check_branch
          %226 = sbr.rel (%p224) target = $region40
        $region39: #{tpu_custom_call.1} parent=31 // pred_region
          %s228 = ssub.s32 128, 128
          %229 = vsyncadd %s220, %s228
          %s230 = smul.addr %s20, 128
          %s231 = scalar_lea.hbm %s3, %s230
          %s233 = sshll.u32 %s223, 4
          %s234 = int_to_ptr.vmem [resolvable:$true] %s233
          %236 = dma.vmem_to_hbm [thread:$0]  %s234, 128, %s231, %s220
        $region40: #{tpu_custom_call.1} parent=31 // pred_fallthru
          _
      $region32: #{tpu_custom_call.1} parent=5 // pred_fallthru
        _
      %p237 = scmp.le.s32.totalorder 2, %s15
      // Predicated region
      $region41: #{tpu_custom_call.1} parent=5 // pred_check
        %p238 = pneg %p237
      $region42: #{tpu_custom_call.1} parent=5 // pred_check_branch
        %240 = sbr.rel (%p238) target = $region44
      $region43: #{tpu_custom_call.1} parent=5 // pred_region
        %s241 = ssub.s32 %s15, 2
        // Predicated region
        $region45: #{tpu_custom_call.1} parent=43 // pred_check
          %p242 = pneg %p112
        $region46: #{tpu_custom_call.1} parent=43 // pred_check_branch
          %244 = sbr.rel (%p242) target = $region48
        $region47: #{tpu_custom_call.1} parent=43 // pred_region
          %s245 = sand.u32 %s97, 1
          %s246 = scalar_lea.sflag [#allocation4], %s245
          %s247 = sand.u32 %s97, 1
          %s248 = smul.addr %s247, 8
          %s249 = scalar_lea.vmem [#allocation5], %s248
          %250 = dma.done %s246, 128
        $region48: #{tpu_custom_call.1} parent=43 // pred_fallthru
          _
      $region44: #{tpu_custom_call.1} parent=5 // pred_fallthru
        _
    $region6: #{tpu_custom_call.1} parent=1 // loop_footer
      %s19 = sadd.s32 1, %s15
    $region7: #{tpu_custom_call.1} parent=1 // loop_footer_branch
      %14 = sbr.rel target = $region3
    $region8: #{tpu_custom_call.1} parent=1 // loop_exit
      _
    %251 = vsyncpa [#allocation3], 1
    %s252 = scalar_lea.sflag [#allocation3], 1
    %253 = vsyncpa %s252, 1
    %254 = vsyncpa [#allocation4], 1
    %s255 = scalar_lea.sflag [#allocation4], 1
    %256 = vsyncpa %s255, 1

</llo_original>
